<compile_context>
chip_gen: v6e
topology: v6e:2x2x1
jax: 0.10.0
libtpu: 0.0.40
codegen_flags: <defaults>
</compile_context>

<pallas_src>
import functools

import jax
import jax.numpy as jnp
from jax.experimental import pallas as pl
from jax.experimental.pallas import tpu as pltpu

ALPHA = 0.25                      # module __init__ arg (deterministic, in-script)
GAMMA = 2.0                       # unused in the PyTorch forward, kept for fidelity
ALPHA_VEC = (ALPHA, 1.0 - ALPHA)  # torch.tensor([alpha, 1 - alpha])

_ARBITRARY = getattr(pltpu, "ARBITRARY", "arbitrary")
_CORE_PARALLEL = getattr(pltpu, "CORE_PARALLEL", getattr(pltpu, "PARALLEL", "parallel"))


def _tpu_topology():
    """Best-effort (tensorcores per device, physical VMEM bytes or None)."""
    num_cores, vmem_bytes = 1, None
    try:
        info = pltpu.get_tpu_info()
        v = getattr(info, "vmem_capacity_bytes", None)
        if v:
            vmem_bytes = int(v)
        for attr in ("num_cores", "core_count", "num_tensorcores", "tensorcore_count"):
            c = getattr(info, attr, None)
            if isinstance(c, int) and c > 0:
                num_cores = c
                break
    except Exception:
        pass
    try:
        kind = jax.devices()[0].device_kind.lower()
        if num_cores == 1 and ("v7" in kind or "7x" in kind):
            num_cores = 2          # v7x exposes 2 TensorCores per chip/device
    except Exception:
        pass
    return num_cores, vmem_bytes


def _choose_tile_n(n, c, itemsize, vmem_limit):
    """Largest row tile that fits VMEM, accounting for 128-lane padding of narrow blocks."""
    lane_c = ((c + 127) // 128) * 128                 # lane-padded class width in VMEM
    # Pipelined inputs: 2 heads x 2 buffers of (tile_n, C) logits + 2 buffers of the
    # fused (tile_n, 2) int32 targets (lane-padded to 128 lanes).
    inputs = 2 * 2 * lane_c * itemsize + 2 * 128 * 4
    # f32 elementwise temporaries (upcast logits / shifted / exp / one-hot select) plus
    # the narrow (tile_n, 1) f32 temporaries, all lane-padded.
    temps = 5 * lane_c * 4 + 8 * 128 * 4
    per_row = inputs + temps
    budget = int(vmem_limit * 0.65)
    t = budget // max(per_row, 1)
    t = max(8, min(t, 32 * 1024))
    t = (t // 8) * 8
    n_rounded = ((n + 7) // 8) * 8
    return int(max(8, min(t, n_rounded)))


def _joint_focal_partial_kernel(n_valid, tiles_per_slice,
                                act_logits_ref, loc_logits_ref, tgt_ref,
                                out_ref, acc_ref):
    """Accumulates per-slice partial sums over the tiles of one row-range slice.

    acc_ref : SMEM (4,) f32 scratch = [sum CE_act, sum CE_loc, sum BCE, sum at]
    out_ref : SMEM (1, 4) block, written only at the last tile of this slice.
    """
    p = pl.program_id(0)          # slice (TensorCore on v7x)
    i = pl.program_id(1)          # reduction tile index within the slice

    @pl.when(i == 0)
    def _init():
        acc_ref[0] = 0.0
        acc_ref[1] = 0.0
        acc_ref[2] = 0.0
        acc_ref[3] = 0.0

    tile_n, C = act_logits_ref.shape
    col = jax.lax.broadcasted_iota(jnp.int32, (tile_n, C), 1)
    row = jax.lax.broadcasted_iota(jnp.int32, (tile_n, 1), 0)
    # Logical (unclamped) row index: rows of duplicated / ragged boundary tiles land
    # >= n_valid and are dropped by the select masks below.
    global_row = (p * tiles_per_slice + i) * tile_n + row
    valid = global_row < n_valid                                     # (tile_n, 1)

    tgt_both = tgt_ref[...]                                          # (tile_n, 2) int32

    def head(logits_ref, tgt_col):
        logits = logits_ref[...].astype(jnp.float32)                 # upcast after the (possibly bf16) load
        tgt = tgt_both[:, tgt_col:tgt_col + 1]                       # (tile_n, 1) i32
        m = jnp.max(logits, axis=1, keepdims=True)                   # (tile_n, 1)
        e = jnp.exp(logits - m)
        lse = m + jnp.log(jnp.sum(e, axis=1, keepdims=True))
        tgt_logit = jnp.sum(jnp.where(col == tgt, logits, 0.0), axis=1, keepdims=True)
        ce = jnp.sum(jnp.where(valid, lse - tgt_logit, 0.0))         # CrossEntropy(sum) partial
        # argmax(logits) == target, up to tie-break: exact f32 compare of the gathered
        # target logit against the row max (ties are measure-zero for float logits).
        res = tgt_logit == m                                         # (tile_n, 1) bool
        return ce, res

    ce_act, act_res = head(act_logits_ref, 0)
    ce_loc, loc_res = head(loc_logits_ref, 1)

    # BCELoss(sum)(act_res, loc_res) with PyTorch's log clamp at -100: for {0,1} inputs the
    # per-row loss is exactly 0 (match) or 100 (mismatch). Branch-free, no log/-inf on the VPU.
    bce_rows = jnp.where(act_res == loc_res, 0.0, 100.0)
    bce = jnp.sum(jnp.where(valid, bce_rows, 0.0))
    # at = alpha_vec[loc_res.long()]
    at = jnp.where(loc_res, ALPHA_VEC[1], ALPHA_VEC[0])
    sum_at = jnp.sum(jnp.where(valid, at, 0.0))

    acc_ref[0] += ce_act
    acc_ref[1] += ce_loc
    acc_ref[2] += bce
    acc_ref[3] += sum_at

    @pl.when(i == pl.num_programs(1) - 1)
    def _finalize():
        out_ref[0, 0] = acc_ref[0]
        out_ref[0, 1] = acc_ref[1]
        out_ref[0, 2] = acc_ref[2]
        out_ref[0, 3] = acc_ref[3]


def joint_classify_focal_loss(act_predict, act_target, loc_predict, loc_target,
                              *, tile_n=None, num_slices=None):
    """act_predict / loc_predict: (N, C) float logits (f32 or bf16 — DMA'd as-is);
       act_target / loc_target: (N,) integer labels."""
    N, C = act_predict.shape
    assert loc_predict.shape == (N, C)
    itemsize = jnp.dtype(act_predict.dtype).itemsize

    num_cores, vmem_cap = _tpu_topology()
    if vmem_cap:
        # ~75% of physical VMEM (96 MiB on 128 MiB parts, 48 MiB on v7x's 64 MiB parts).
        vmem_limit = max(32 * 1024 * 1024, min(int(vmem_cap * 3 // 4), 112 * 1024 * 1024))
    else:
        vmem_limit = 48 * 1024 * 1024            # safe on every generation

    if tile_n is None:
        tile_n = _choose_tile_n(N, C, itemsize, vmem_limit)
    tile_n = max(8, (int(tile_n) // 8) * 8)

    num_tiles = pl.cdiv(N, tile_n)
    if num_slices is None:
        num_slices = num_cores if (num_cores > 1 and num_tiles >= num_cores) else 1
    num_slices = max(1, min(int(num_slices), num_tiles))
    tiles_per_slice = pl.cdiv(num_tiles, num_slices)
    last_block = num_tiles - 1
    use_core_parallel = (num_slices > 1) and (num_slices == num_cores)

    # Fused (N, 2) int32 targets: one tiny DMA / lane-padded VMEM block per grid step.
    targets = jnp.stack([act_target.astype(jnp.int32),
                         loc_target.astype(jnp.int32)], axis=1)

    # TODO(synk): for class counts with 128 % C == 0, a zero-copy reshape of the logits to
    # (N*C/128, 128) plus segmented per-C-lane-group max/sum reductions would make the DMA
    # and VPU/EUP work lane-dense (~128/C x fewer vreg ops); deferred — the extra XLU
    # rolls / MXU selection matmuls it needs require hardware profiling to confirm a win.

    kernel = functools.partial(_joint_focal_partial_kernel, N, tiles_per_slice)

    def block_idx(p, i):
        # Clamp so fully out-of-range tiles (odd tile counts split across slices) re-read
        # the last real block; their rows are dropped by the `valid` mask in the kernel.
        return jnp.minimum(p * tiles_per_slice + i, last_block)

    logits_spec = pl.BlockSpec((tile_n, C), lambda p, i: (block_idx(p, i), 0))
    tgt_spec = pl.BlockSpec((tile_n, 2), lambda p, i: (block_idx(p, i), 0))

    cost = pl.CostEstimate(
        flops=int(10 * N * C),
        transcendentals=int(2 * N * C + 4 * N),
        bytes_accessed=int(2 * N * C * itemsize + N * 2 * 4 + num_slices * 4 * 4),
    )

    sem0 = _CORE_PARALLEL if use_core_parallel else _ARBITRARY

    partials = pl.pallas_call(
        kernel,
        out_shape=jax.ShapeDtypeStruct((num_slices, 4), jnp.float32),
        grid_spec=pltpu.PrefetchScalarGridSpec(
            num_scalar_prefetch=0,
            grid=(num_slices, tiles_per_slice),
            in_specs=[logits_spec, logits_spec, tgt_spec],
            out_specs=pl.BlockSpec((1, 4), lambda p, i: (p, 0),
                                   memory_space=pltpu.MemorySpace.SMEM),
            scratch_shapes=[pltpu.SMEM((4,), jnp.float32)],
        ),
        compiler_params=pltpu.CompilerParams(
            dimension_semantics=(sem0, _ARBITRARY),
            vmem_limit_bytes=int(vmem_limit),
        ),
        cost_estimate=cost,
    )(act_predict, loc_predict, targets)

    # Tiny scalar finalize in the wrapper (closed form for the focal term: bce/pt are
    # global scalars, so F_loss.mean() == (1 - pt)^2 * bce * mean(at)).
    totals = jnp.sum(partials, axis=0)
    ce_act, ce_loc, bce, sum_at = totals[0], totals[1], totals[2], totals[3]
    pt = jnp.exp(-bce)
    f_mean = (1.0 - pt) ** 2 * bce * (sum_at / N)
    return ce_act + ce_loc + f_mean


def _reference(act_predict, act_target, loc_predict, loc_target):
    """Pure-JAX reproduction of the PyTorch forward (torch-faithful argmax tie-break)."""
    act_predict = act_predict.astype(jnp.float32)
    loc_predict = loc_predict.astype(jnp.float32)

    def ce_sum(logits, tgt):
        logp = jax.nn.log_softmax(logits, axis=1)
        return -jnp.sum(logp[jnp.arange(logits.shape[0]), tgt])

    act_loss = ce_sum(act_predict, act_target)
    loc_loss = ce_sum(loc_predict, loc_target)
    act_res = (jnp.argmax(act_predict, axis=1) == act_target).astype(jnp.float32)
    loc_res = (jnp.argmax(loc_predict, axis=1) == loc_target).astype(jnp.float32)
    log_x = jnp.maximum(jnp.log(act_res), -100.0)
    log_1mx = jnp.maximum(jnp.log(1.0 - act_res), -100.0)
    bce = jnp.sum(-(loc_res * log_x + (1.0 - loc_res) * log_1mx))
    at = jnp.where(loc_res > 0.5, ALPHA_VEC[1], ALPHA_VEC[0])
    pt = jnp.exp(-bce)
    f_loss = at * (1.0 - pt) ** 2 * bce
    return act_loss + loc_loss + jnp.mean(f_loss)


if __name__ == "__main__":
    key = jax.random.PRNGKey(0)
    keys = jax.random.split(key, 16)

    # Test 1: tiny f32 case (single tile / single slice).
    N, C = 8, 16
    act_p = jax.random.normal(keys[0], (N, C), dtype=jnp.float32)
    loc_p = jax.random.normal(keys[1], (N, C), dtype=jnp.float32)
    act_t = jax.random.randint(keys[2], (N,), 0, C, dtype=jnp.int32)
    loc_t = jax.random.randint(keys[3], (N,), 0, C, dtype=jnp.int32)
    loss = jax.block_until_ready(joint_classify_focal_loss(act_p, act_t, loc_p, loc_t))
    ref = _reference(act_p, act_t, loc_p, loc_t)
    assert jnp.allclose(loss, ref, rtol=1e-5, atol=1e-4), (loss, ref)

    # Test 2: ragged N, small forced tile, forced 2-slice split -> exercises the clamped
    # duplicate tiles, the partial boundary block and the `valid` mask (no wrapper pad).
    N2, C2 = 100, 16
    act_p2 = jax.random.normal(keys[4], (N2, C2), dtype=jnp.float32)
    loc_p2 = jax.random.normal(keys[5], (N2, C2), dtype=jnp.float32)
    act_t2 = jax.random.randint(keys[6], (N2,), 0, C2, dtype=jnp.int32)
    loc_t2 = jax.random.randint(keys[7], (N2,), 0, C2, dtype=jnp.int32)
    loss2 = jax.block_until_ready(
        joint_classify_focal_loss(act_p2, act_t2, loc_p2, loc_t2, tile_n=16, num_slices=2))
    ref2 = _reference(act_p2, act_t2, loc_p2, loc_t2)
    assert jnp.allclose(loss2, ref2, rtol=1e-5, atol=1e-3), (loss2, ref2)

    # Test 3: bf16 logits DMA'd as bf16 (upcast inside the kernel). Rows are permutations
    # of distinct bf16-exact values, so the argmax is tie-free and the simplified
    # `target_logit == row_max` test matches torch's argmax exactly.
    base = jnp.arange(C, dtype=jnp.float32) * 0.125 - 1.0
    act_bf16 = jax.vmap(lambda k: jax.random.permutation(k, base))(
        jax.random.split(keys[8], N)).astype(jnp.bfloat16)
    loc_bf16 = jax.vmap(lambda k: jax.random.permutation(k, base))(
        jax.random.split(keys[9], N)).astype(jnp.bfloat16)
    loss3 = jax.block_until_ready(
        joint_classify_focal_loss(act_bf16, act_t, loc_bf16, loc_t))
    ref3 = _reference(act_bf16, act_t, loc_bf16, loc_t)
    assert jnp.allclose(loss3, ref3, rtol=1e-4, atol=1e-3), (loss3, ref3)

    # Test 4: default (large) tile path on a bigger-but-still-small batch.
    N4, C4 = 4096, 16
    act_p4 = jax.random.normal(keys[10], (N4, C4), dtype=jnp.float32)
    loc_p4 = jax.random.normal(keys[11], (N4, C4), dtype=jnp.float32)
    act_t4 = jax.random.randint(keys[12], (N4,), 0, C4, dtype=jnp.int32)
    loc_t4 = jax.random.randint(keys[13], (N4,), 0, C4, dtype=jnp.int32)
    loss4 = jax.block_until_ready(
        joint_classify_focal_loss(act_p4, act_t4, loc_p4, loc_t4))
    ref4 = _reference(act_p4, act_t4, loc_p4, loc_t4)
    assert jnp.allclose(loss4, ref4, rtol=2e-5, atol=1e-2), (loss4, ref4)

    print("KERNEL_OK")
</pallas_src>

<mosaic_0001>
module attributes {stable_mosaic.version = 11 : i64} {
  func.func @_joint_focal_partial_kernel(%arg0: i32, %arg1: i32, %arg2: memref<8x16xf32, #tpu.memory_space<vmem>>, %arg3: memref<8x16xf32, #tpu.memory_space<vmem>>, %arg4: memref<8x2xi32, #tpu.memory_space<vmem>>, %arg5: memref<1x4xf32, #tpu.memory_space<smem>>, %arg6: memref<4xf32, #tpu.memory_space<smem>>) attributes {dimension_semantics = [#tpu.dimension_semantics<arbitrary>, #tpu.dimension_semantics<arbitrary>], iteration_bounds = array<i64: 1, 1>, scalar_prefetch = 0 : i64, scratch_operands = 1 : i64, tpu.core_type = #tpu.core_type<tc>, window_params = [{transform_indices = @transform_0, window_bounds = array<i64: 8, 16>}, {transform_indices = @transform_1, window_bounds = array<i64: 8, 16>}, {transform_indices = @transform_2, window_bounds = array<i64: 8, 2>}, {transform_indices = @transform_3, window_bounds = array<i64: 1, 4>}]} {
    %c0_i32 = arith.constant 0 : i32
    %0 = arith.cmpi eq, %arg1, %c0_i32 : i32
    %1 = arith.extui %0 : i1 to i32
    %c0_i32_0 = arith.constant 0 : i32
    %2 = arith.cmpi ne, %1, %c0_i32_0 : i32
    scf.if %2 {
      %cst_34 = arith.constant 0.000000e+00 : f32
      %c0_35 = arith.constant 0 : index
      %98 = memref.load %arg6[%c0_35] : memref<4xf32, #tpu.memory_space<smem>>
      memref.store %cst_34, %arg6[%c0_35] : memref<4xf32, #tpu.memory_space<smem>>
      %cst_36 = arith.constant 0.000000e+00 : f32
      %c1_37 = arith.constant 1 : index
      %99 = memref.load %arg6[%c1_37] : memref<4xf32, #tpu.memory_space<smem>>
      memref.store %cst_36, %arg6[%c1_37] : memref<4xf32, #tpu.memory_space<smem>>
      %cst_38 = arith.constant 0.000000e+00 : f32
      %c2_39 = arith.constant 2 : index
      %100 = memref.load %arg6[%c2_39] : memref<4xf32, #tpu.memory_space<smem>>
      memref.store %cst_38, %arg6[%c2_39] : memref<4xf32, #tpu.memory_space<smem>>
      %cst_40 = arith.constant 0.000000e+00 : f32
      %c3_41 = arith.constant 3 : index
      %101 = memref.load %arg6[%c3_41] : memref<4xf32, #tpu.memory_space<smem>>
      memref.store %cst_40, %arg6[%c3_41] : memref<4xf32, #tpu.memory_space<smem>>
    } else {
    }
    %3 = tpu.iota {dimensions = array<i32: 1>} : vector<8x16xi32>
    %4 = tpu.iota {dimensions = array<i32: 0>} : vector<8x1xi32>
    %c1_i32 = arith.constant 1 : i32
    %5 = arith.muli %arg0, %c1_i32 : i32
    %6 = arith.addi %5, %arg1 : i32
    %c8_i32 = arith.constant 8 : i32
    %7 = arith.muli %6, %c8_i32 : i32
    %8 = vector.broadcast %7 : i32 to vector<8x1xi32>
    %9 = arith.addi %8, %4 : vector<8x1xi32>
    %c8_i32_1 = arith.constant 8 : i32
    %10 = vector.broadcast %c8_i32_1 : i32 to vector<8x1xi32>
    %11 = arith.cmpi slt, %9, %10 : vector<8x1xi32>
    %c0 = arith.constant 0 : index
    %c0_2 = arith.constant 0 : index
    %12 = vector.load %arg4[%c0, %c0_2] : memref<8x2xi32, #tpu.memory_space<vmem>>, vector<8x2xi32>
    %c0_3 = arith.constant 0 : index
    %c0_4 = arith.constant 0 : index
    %13 = vector.load %arg2[%c0_3, %c0_4] : memref<8x16xf32, #tpu.memory_space<vmem>>, vector<8x16xf32>
    %14 = vector.extract_strided_slice %12 {offsets = [0, 0], sizes = [8, 1], strides = [1, 1]} : vector<8x2xi32> to vector<8x1xi32>
    %cst = arith.constant dense<0xFF800000> : vector<8xf32>
    %15 = vector.multi_reduction <maximumf>, %13, %cst [1] : vector<8x16xf32> to vector<8xf32>
    %16 = vector.shape_cast %15 : vector<8xf32> to vector<8x1xf32>
    %17 = vector.broadcast %16 : vector<8x1xf32> to vector<8x16xf32>
    %18 = arith.subf %13, %17 : vector<8x16xf32>
    %19 = math.exp %18 : vector<8x16xf32>
    %cst_5 = arith.constant dense<0.000000e+00> : vector<8xf32>
    %20 = vector.multi_reduction <add>, %19, %cst_5 [1] : vector<8x16xf32> to vector<8xf32>
    %21 = vector.shape_cast %20 : vector<8xf32> to vector<8x1xf32>
    %22 = math.log %21 : vector<8x1xf32>
    %23 = arith.addf %16, %22 : vector<8x1xf32>
    %24 = vector.broadcast %14 : vector<8x1xi32> to vector<8x16xi32>
    %25 = arith.cmpi eq, %3, %24 : vector<8x16xi32>
    %cst_6 = arith.constant 0.000000e+00 : f32
    %26 = vector.broadcast %cst_6 : f32 to vector<8x16xf32>
    %27 = arith.select %25, %13, %26 : vector<8x16xi1>, vector<8x16xf32>
    %cst_7 = arith.constant dense<0.000000e+00> : vector<8xf32>
    %28 = vector.multi_reduction <add>, %27, %cst_7 [1] : vector<8x16xf32> to vector<8xf32>
    %29 = vector.shape_cast %28 : vector<8xf32> to vector<8x1xf32>
    %30 = arith.subf %23, %29 : vector<8x1xf32>
    %cst_8 = arith.constant 0.000000e+00 : f32
    %31 = vector.broadcast %cst_8 : f32 to vector<8x1xf32>
    %32 = arith.select %11, %30, %31 : vector<8x1xi1>, vector<8x1xf32>
    %33 = vector.shape_cast %32 : vector<8x1xf32> to vector<1x8x1xf32>
    %cst_9 = arith.constant dense<0.000000e+00> : vector<1xf32>
    %34 = vector.multi_reduction <add>, %33, %cst_9 [1, 2] : vector<1x8x1xf32> to vector<1xf32>
    %35 = vector.shape_cast %34 : vector<1xf32> to vector<1x1x1xf32>
    %36 = vector.extract %35[0, 0, 0] : f32 from vector<1x1x1xf32>
    %37 = arith.cmpf oeq, %29, %16 : vector<8x1xf32>
    %c0_10 = arith.constant 0 : index
    %c0_11 = arith.constant 0 : index
    %38 = vector.load %arg3[%c0_10, %c0_11] : memref<8x16xf32, #tpu.memory_space<vmem>>, vector<8x16xf32>
    %39 = vector.extract_strided_slice %12 {offsets = [0, 1], sizes = [8, 1], strides = [1, 1]} : vector<8x2xi32> to vector<8x1xi32>
    %cst_12 = arith.constant dense<0xFF800000> : vector<8xf32>
    %40 = vector.multi_reduction <maximumf>, %38, %cst_12 [1] : vector<8x16xf32> to vector<8xf32>
    %41 = vector.shape_cast %40 : vector<8xf32> to vector<8x1xf32>
    %42 = vector.broadcast %41 : vector<8x1xf32> to vector<8x16xf32>
    %43 = arith.subf %38, %42 : vector<8x16xf32>
    %44 = math.exp %43 : vector<8x16xf32>
    %cst_13 = arith.constant dense<0.000000e+00> : vector<8xf32>
    %45 = vector.multi_reduction <add>, %44, %cst_13 [1] : vector<8x16xf32> to vector<8xf32>
    %46 = vector.shape_cast %45 : vector<8xf32> to vector<8x1xf32>
    %47 = math.log %46 : vector<8x1xf32>
    %48 = arith.addf %41, %47 : vector<8x1xf32>
    %49 = vector.broadcast %39 : vector<8x1xi32> to vector<8x16xi32>
    %50 = arith.cmpi eq, %3, %49 : vector<8x16xi32>
    %cst_14 = arith.constant 0.000000e+00 : f32
    %51 = vector.broadcast %cst_14 : f32 to vector<8x16xf32>
    %52 = arith.select %50, %38, %51 : vector<8x16xi1>, vector<8x16xf32>
    %cst_15 = arith.constant dense<0.000000e+00> : vector<8xf32>
    %53 = vector.multi_reduction <add>, %52, %cst_15 [1] : vector<8x16xf32> to vector<8xf32>
    %54 = vector.shape_cast %53 : vector<8xf32> to vector<8x1xf32>
    %55 = arith.subf %48, %54 : vector<8x1xf32>
    %cst_16 = arith.constant 0.000000e+00 : f32
    %56 = vector.broadcast %cst_16 : f32 to vector<8x1xf32>
    %57 = arith.select %11, %55, %56 : vector<8x1xi1>, vector<8x1xf32>
    %58 = vector.shape_cast %57 : vector<8x1xf32> to vector<1x8x1xf32>
    %cst_17 = arith.constant dense<0.000000e+00> : vector<1xf32>
    %59 = vector.multi_reduction <add>, %58, %cst_17 [1, 2] : vector<1x8x1xf32> to vector<1xf32>
    %60 = vector.shape_cast %59 : vector<1xf32> to vector<1x1x1xf32>
    %61 = vector.extract %60[0, 0, 0] : f32 from vector<1x1x1xf32>
    %62 = arith.cmpf oeq, %54, %41 : vector<8x1xf32>
    %63 = arith.xori %37, %62 : vector<8x1xi1>
    %cst_18 = arith.constant dense<true> : vector<8x1xi1>
    %64 = arith.xori %63, %cst_18 : vector<8x1xi1>
    %cst_19 = arith.constant 0.000000e+00 : f32
    %cst_20 = arith.constant 1.000000e+02 : f32
    %65 = vector.broadcast %cst_19 : f32 to vector<8x1xf32>
    %66 = vector.broadcast %cst_20 : f32 to vector<8x1xf32>
    %67 = arith.select %64, %65, %66 : vector<8x1xi1>, vector<8x1xf32>
    %cst_21 = arith.constant 0.000000e+00 : f32
    %68 = vector.broadcast %cst_21 : f32 to vector<8x1xf32>
    %69 = arith.select %11, %67, %68 : vector<8x1xi1>, vector<8x1xf32>
    %70 = vector.shape_cast %69 : vector<8x1xf32> to vector<1x8x1xf32>
    %cst_22 = arith.constant dense<0.000000e+00> : vector<1xf32>
    %71 = vector.multi_reduction <add>, %70, %cst_22 [1, 2] : vector<1x8x1xf32> to vector<1xf32>
    %72 = vector.shape_cast %71 : vector<1xf32> to vector<1x1x1xf32>
    %73 = vector.extract %72[0, 0, 0] : f32 from vector<1x1x1xf32>
    %cst_23 = arith.constant 7.500000e-01 : f32
    %cst_24 = arith.constant 2.500000e-01 : f32
    %74 = vector.broadcast %cst_23 : f32 to vector<8x1xf32>
    %75 = vector.broadcast %cst_24 : f32 to vector<8x1xf32>
    %76 = arith.select %62, %74, %75 : vector<8x1xi1>, vector<8x1xf32>
    %cst_25 = arith.constant 0.000000e+00 : f32
    %77 = vector.broadcast %cst_25 : f32 to vector<8x1xf32>
    %78 = arith.select %11, %76, %77 : vector<8x1xi1>, vector<8x1xf32>
    %79 = vector.shape_cast %78 : vector<8x1xf32> to vector<1x8x1xf32>
    %cst_26 = arith.constant dense<0.000000e+00> : vector<1xf32>
    %80 = vector.multi_reduction <add>, %79, %cst_26 [1, 2] : vector<1x8x1xf32> to vector<1xf32>
    %81 = vector.shape_cast %80 : vector<1xf32> to vector<1x1x1xf32>
    %82 = vector.extract %81[0, 0, 0] : f32 from vector<1x1x1xf32>
    %c0_27 = arith.constant 0 : index
    %83 = memref.load %arg6[%c0_27] : memref<4xf32, #tpu.memory_space<smem>>
    %84 = arith.addf %83, %36 : f32
    %c0_28 = arith.constant 0 : index
    %85 = memref.load %arg6[%c0_28] : memref<4xf32, #tpu.memory_space<smem>>
    memref.store %84, %arg6[%c0_28] : memref<4xf32, #tpu.memory_space<smem>>
    %c1 = arith.constant 1 : index
    %86 = memref.load %arg6[%c1] : memref<4xf32, #tpu.memory_space<smem>>
    %87 = arith.addf %86, %61 : f32
    %c1_29 = arith.constant 1 : index
    %88 = memref.load %arg6[%c1_29] : memref<4xf32, #tpu.memory_space<smem>>
    memref.store %87, %arg6[%c1_29] : memref<4xf32, #tpu.memory_space<smem>>
    %c2 = arith.constant 2 : index
    %89 = memref.load %arg6[%c2] : memref<4xf32, #tpu.memory_space<smem>>
    %90 = arith.addf %89, %73 : f32
    %c2_30 = arith.constant 2 : index
    %91 = memref.load %arg6[%c2_30] : memref<4xf32, #tpu.memory_space<smem>>
    memref.store %90, %arg6[%c2_30] : memref<4xf32, #tpu.memory_space<smem>>
    %c3 = arith.constant 3 : index
    %92 = memref.load %arg6[%c3] : memref<4xf32, #tpu.memory_space<smem>>
    %93 = arith.addf %92, %82 : f32
    %c3_31 = arith.constant 3 : index
    %94 = memref.load %arg6[%c3_31] : memref<4xf32, #tpu.memory_space<smem>>
    memref.store %93, %arg6[%c3_31] : memref<4xf32, #tpu.memory_space<smem>>
    %c0_i32_32 = arith.constant 0 : i32
    %95 = arith.cmpi eq, %arg1, %c0_i32_32 : i32
    %96 = arith.extui %95 : i1 to i32
    %c0_i32_33 = arith.constant 0 : i32
    %97 = arith.cmpi ne, %96, %c0_i32_33 : i32
    scf.if %97 {
      %c0_34 = arith.constant 0 : index
      %98 = memref.load %arg6[%c0_34] : memref<4xf32, #tpu.memory_space<smem>>
      %c0_35 = arith.constant 0 : index
      %c0_36 = arith.constant 0 : index
      %99 = memref.load %arg5[%c0_35, %c0_36] : memref<1x4xf32, #tpu.memory_space<smem>>
      memref.store %98, %arg5[%c0_35, %c0_36] : memref<1x4xf32, #tpu.memory_space<smem>>
      %c1_37 = arith.constant 1 : index
      %100 = memref.load %arg6[%c1_37] : memref<4xf32, #tpu.memory_space<smem>>
      %c0_38 = arith.constant 0 : index
      %c1_39 = arith.constant 1 : index
      %101 = memref.load %arg5[%c0_38, %c1_39] : memref<1x4xf32, #tpu.memory_space<smem>>
      memref.store %100, %arg5[%c0_38, %c1_39] : memref<1x4xf32, #tpu.memory_space<smem>>
      %c2_40 = arith.constant 2 : index
      %102 = memref.load %arg6[%c2_40] : memref<4xf32, #tpu.memory_space<smem>>
      %c0_41 = arith.constant 0 : index
      %c2_42 = arith.constant 2 : index
      %103 = memref.load %arg5[%c0_41, %c2_42] : memref<1x4xf32, #tpu.memory_space<smem>>
      memref.store %102, %arg5[%c0_41, %c2_42] : memref<1x4xf32, #tpu.memory_space<smem>>
      %c3_43 = arith.constant 3 : index
      %104 = memref.load %arg6[%c3_43] : memref<4xf32, #tpu.memory_space<smem>>
      %c0_44 = arith.constant 0 : index
      %c3_45 = arith.constant 3 : index
      %105 = memref.load %arg5[%c0_44, %c3_45] : memref<1x4xf32, #tpu.memory_space<smem>>
      memref.store %104, %arg5[%c0_44, %c3_45] : memref<1x4xf32, #tpu.memory_space<smem>>
    } else {
    }
    return
  }
  func.func @transform_0(%arg0: i32, %arg1: i32) -> (i32, i32) {
    %c1_i32 = arith.constant 1 : i32
    %0 = arith.muli %arg0, %c1_i32 : i32
    %1 = arith.addi %0, %arg1 : i32
    %c0_i32 = arith.constant 0 : i32
    %2 = arith.minsi %1, %c0_i32 : i32
    %c0_i32_0 = arith.constant 0 : i32
    %c0_i32_1 = arith.constant 0 : i32
    return %2, %c0_i32_0 : i32, i32
  }
  func.func @transform_1(%arg0: i32, %arg1: i32) -> (i32, i32) {
    %c1_i32 = arith.constant 1 : i32
    %0 = arith.muli %arg0, %c1_i32 : i32
    %1 = arith.addi %0, %arg1 : i32
    %c0_i32 = arith.constant 0 : i32
    %2 = arith.minsi %1, %c0_i32 : i32
    %c0_i32_0 = arith.constant 0 : i32
    %c0_i32_1 = arith.constant 0 : i32
    return %2, %c0_i32_0 : i32, i32
  }
  func.func @transform_2(%arg0: i32, %arg1: i32) -> (i32, i32) {
    %c1_i32 = arith.constant 1 : i32
    %0 = arith.muli %arg0, %c1_i32 : i32
    %1 = arith.addi %0, %arg1 : i32
    %c0_i32 = arith.constant 0 : i32
    %2 = arith.minsi %1, %c0_i32 : i32
    %c0_i32_0 = arith.constant 0 : i32
    %c0_i32_1 = arith.constant 0 : i32
    return %2, %c0_i32_0 : i32, i32
  }
  func.func @transform_3(%arg0: i32, %arg1: i32) -> (i32, i32) {
    %c0_i32 = arith.constant 0 : i32
    %c0_i32_0 = arith.constant 0 : i32
    return %arg0, %c0_i32 : i32, i32
  }
}

</mosaic_0001>

<llo_original>
// kernel: tpu_custom_call.1
$region0: #{tpu_custom_call.1}
  #allocation0 [shape = 'u32[]', space=smem, size = 0x4, offset = 0x4, fixed_abs, tag = 'smem constant byte address 0x4 - core index']
  #allocation1 [shape = 'u32[144,128]{1,0:T(1,128)}', space=vmem, size = 0x12000, scoped, tag = 'internal scratch']
  #allocation2 [shape = 'f32[4]{0:T(128)}', space=smem, size = 0x200, scoped, tag = 'scratch operand']
  %s0 = inlined_call_operand.vmem [shape: f32[8,16], index: 0, kind: input, shape index: {}]
  %s1 = inlined_call_operand.hbm [shape: f32[8,16], index: 1, kind: input, shape index: {}]
  %s2 = inlined_call_operand.vmem [shape: s32[8,2], index: 2, kind: input, shape index: {}]
  %s3 = inlined_call_operand.hbm [shape: f32[1,4], index: 3, kind: output, shape index: {}]
  %s4 = sld [smem:[#allocation0]]
  $region34: #{tpu_custom_call.1} parent=0
    _
  %s6 = ssub.s32 1, %s4
  %s7 = scalar_select 0, %s6, %s4
  $region1: #{tpu_custom_call.1} parent=0
    #allocation3 [shape = 'u8[4096]{0}', space=vmem, size = 0x1000, scoped, tag = 'input window, operand 1, single buffered']
    #allocation4 [shape = 's32[1]{0}', space=sflag, size = 0x4, scoped, tag = 'scoped memory for tpu_custom_call.1']
    #allocation5 [shape = 's32[1]{0}', space=sflag, size = 0x4, scoped, tag = 'scoped memory for tpu_custom_call.1']
    #allocation6 [shape = 'u8[512]{0}', space=smem, size = 0x200, scoped, tag = 'output window, operand 0, single buffered']
    %8 = vsyncpa [#allocation4], 0
    %9 = vsyncpa [#allocation5], 0
    // Predicated region
    $region2: #{tpu_custom_call.1} parent=1 // pred_check
      _
    $region3: #{tpu_custom_call.1} parent=1 // pred_check_branch
      %11 = sbr.rel (0) target = $region5
    $region4: #{tpu_custom_call.1} parent=1 // pred_region
      %s12 = sadd.s32 0, 0
      %p13 = scmp.lt.s32.totalorder %s12, 0
      %s14 = scalar_select %p13, %s12, 0
      %p15 = scmp.lt.s32.totalorder %s14, 0
      %s16 = scalar_select %p15, %s14, 0
      %s17 = smul.addr %s16, 8
      %s18 = scalar_lea.vmem %s0, %s17
      %s19 = sadd.s32 0, 0
      %p20 = scmp.lt.s32.totalorder %s19, 0
      %s21 = scalar_select %p20, %s19, 0
    $region5: #{tpu_custom_call.1} parent=1 // pred_fallthru
      _
    // Predicated region
    $region6: #{tpu_custom_call.1} parent=1 // pred_check
      _
    $region7: #{tpu_custom_call.1} parent=1 // pred_check_branch
      %23 = sbr.rel (0) target = $region9
    $region8: #{tpu_custom_call.1} parent=1 // pred_region
      %s24 = sadd.s32 0, 0
      %p25 = scmp.lt.s32.totalorder %s24, 0
      %s26 = scalar_select %p25, %s24, 0
      %s28 = ssub.s32 128, 128
      %29 = vsyncadd [#allocation4], %s28
      %s30 = smul.addr %s26, 128
      %s31 = scalar_lea.hbm %s1, %s30
      %s33 = sshll.u32 [#allocation3], 4
      %s34 = int_to_ptr.vmem [resolvable:$true] %s33
      %36 = dma.hbm_to_vmem [thread:$0]  %s31, 128, %s34, [#allocation4]
    $region9: #{tpu_custom_call.1} parent=1 // pred_fallthru
      _
    // Predicated region
    $region10: #{tpu_custom_call.1} parent=1 // pred_check
      _
    $region11: #{tpu_custom_call.1} parent=1 // pred_check_branch
      %38 = sbr.rel (0) target = $region13
    $region12: #{tpu_custom_call.1} parent=1 // pred_region
      %s39 = sadd.s32 0, 0
      %p40 = scmp.lt.s32.totalorder %s39, 0
      %s41 = scalar_select %p40, %s39, 0
      %p42 = scmp.lt.s32.totalorder %s41, 0
      %s43 = scalar_select %p42, %s41, 0
      %s44 = smul.addr %s43, 8
      %s45 = scalar_lea.vmem %s2, %s44
      %s46 = sadd.s32 0, 0
      %p47 = scmp.lt.s32.totalorder %s46, 0
      %s48 = scalar_select %p47, %s46, 0
    $region13: #{tpu_custom_call.1} parent=1 // pred_fallthru
      _
    // Predicated region
    $region14: #{tpu_custom_call.1} parent=1 // pred_check
      _
    $region15: #{tpu_custom_call.1} parent=1 // pred_check_branch
      %50 = sbr.rel (0) target = $region17
    $region16: #{tpu_custom_call.1} parent=1 // pred_region
      %51 = dma.done [#allocation4], 128
    $region17: #{tpu_custom_call.1} parent=1 // pred_fallthru
      _
    %s52 = sadd.s32 0, 0
    %p53 = scmp.lt.s32.totalorder %s52, 0
    %s54 = scalar_select %p53, %s52, 0
    %p55 = scmp.lt.s32.totalorder %s54, 0
    %s56 = scalar_select %p55, %s54, 0
    %s57 = smul.addr %s56, 8
    %s58 = scalar_lea.vmem %s0, %s57
    %s59 = sadd.s32 0, 0
    %p60 = scmp.lt.s32.totalorder %s59, 0
    %s61 = scalar_select %p60, %s59, 0
    %p62 = scmp.lt.s32.totalorder %s61, 0
    %s63 = scalar_select %p62, %s61, 0
    %s64 = smul.addr %s63, 8
    %s65 = scalar_lea.vmem %s2, %s64
    %s66 = sadd.s32 0, 0
    %p67 = scmp.lt.s32.totalorder %s66, 0
    %s68 = scalar_select %p67, %s66, 0
    %p69 = scmp.lt.s32.totalorder %s68, 0
    %s70 = scalar_select %p69, %s68, 0
    %s71 = smul.addr %s70, 8
    %s72 = scalar_lea.vmem %s0, %s71
    %s73 = sadd.s32 0, 0
    %p74 = scmp.lt.s32.totalorder %s73, 0
    %s75 = scalar_select %p74, %s73, 0
    %s76 = sadd.s32 0, 0
    %p77 = scmp.lt.s32.totalorder %s76, 0
    %s78 = scalar_select %p77, %s76, 0
    %s79 = sadd.s32 0, 0
    %p80 = scmp.lt.s32.totalorder %s79, 0
    %s81 = scalar_select %p80, %s79, 0
    %p82 = scmp.lt.s32.totalorder %s81, 0
    %s83 = scalar_select %p82, %s81, 0
    %s84 = smul.addr %s83, 8
    %s85 = scalar_lea.vmem %s2, %s84
    %s86 = sadd.s32 0, 0
    %p87 = scmp.lt.s32.totalorder %s86, 0
    %s88 = scalar_select %p87, %s86, 0
    %p89 = scmp.eq.s32.totalorder 0, 0
    // Predicated region
    $region18: #{tpu_custom_call.1} parent=1 // pred_check
      %p90 = pneg %p89
    $region19: #{tpu_custom_call.1} parent=1 // pred_check_branch
      %92 = sbr.rel (%p90) target = $region21
    $region20: #{tpu_custom_call.1} parent=1 // pred_region
      %s93 = scalar_lea.smem [#allocation2], 0
      %94 = sst [smem:[%s93]] 0.0
      %s95 = scalar_lea.smem [#allocation2], 1
      %96 = sst [smem:[%s95]] 0.0
      %s97 = scalar_lea.smem [#allocation2], 2
      %98 = sst [smem:[%s97]] 0.0
      %s99 = scalar_lea.smem [#allocation2], 3
      %100 = sst [smem:[%s99]] 0.0
    $region21: #{tpu_custom_call.1} parent=1 // pred_fallthru
      _
    %v101 = vlaneseq
    %v102 = vand.u32 %v101, 127
    %v103 = vlaneseq
    %v104 = vshrl.u32 %v103, 7
    %s105 = sadd.s32 0, 0
    %s106 = smul.u32 %s105, 8
    %v107 = vstv %s106
    %v108 = vadd.s32 %v107, %v104
    %vm109 = vcmp.lt.s32.totalorder %v108, 8
    %v110 = vld [vmem:[%s85] sm:$0xff]
    %v111 = vld [vmem:[%s72] sm:$0xff]
    %vm112 = vcmask 130048
    %v113 = vsel %vm112, %v111, -inf
    %114 = vmax.xlane.f32.xlu0 %v113
    %v115 = vpop.xlane.xlu0 %114
    %v116 = vsub.f32 %v111, %v115
    %v117 = vmul.f32 %v116, 1.442695
    %v118 = vpow.pop %v117
    %v119 = vsel %vm112, %v118, 0.0
    %120 = vadd.xlane.f32.xlu0 %v119
    %v121 = vpop.xlane.xlu0 %120
    %v122 = vlog2.pop %v121
    %v123 = vmul.f32 %v122, 0.6931472
    %v124 = vadd.f32 %v115, %v123
    %125 = vset.pattern.permute.xlu0 0
    %126 = vperm.xlu0 %125, %v110
    %v127 = vpop.permute.xlu0 %126
    %vm128 = vcmp.eq.s32.totalorder %v102, %v127
    %v129 = vsel %vm128, %v111, 0.0
    %v130 = vsel %vm112, %v129, 0.0
    %131 = vadd.xlane.f32.xlu0 %v130
    %v132 = vpop.xlane.xlu0 %131
    %v133 = vsub.f32 %v124, %v132
    %v134 = vsel %vm109, %v133, 0.0
    %vm135 = vcmask 7168
    %v136 = vsel %vm135, %v134, 0.0
    %137 = vadd.xlane.f32.xlu0 %v136
    %v138 = vpop.xlane.xlu0 %137
    %v139 = vrot.slane %v138, 4
    %v140 = vadd.f32 %v138, %v139
    %v141 = vrot.slane %v140, 2
    %v142 = vadd.f32 %v140, %v141
    %v143 = vrot.slane %v142, 1
    %v144 = vadd.f32 %v142, %v143
    %s145 = vtos %v144
    %vm146 = vcmp.eq.f32.partialorder %v132, %v115
    %v147 = vld [vmem:[#allocation3] sm:$0xff]
    %v148 = vsel %vm112, %v147, -inf
    %149 = vmax.xlane.f32.xlu0 %v148
    %v150 = vpop.xlane.xlu0 %149
    %v151 = vsub.f32 %v147, %v150
    %v152 = vmul.f32 %v151, 1.442695
    %v153 = vpow.pop %v152
    %v154 = vsel %vm112, %v153, 0.0
    %155 = vadd.xlane.f32.xlu0 %v154
    %v156 = vpop.xlane.xlu0 %155
    %v157 = vlog2.pop %v156
    %v158 = vmul.f32 %v157, 0.6931472
    %v159 = vadd.f32 %v150, %v158
    %160 = vset.pattern.permute.xlu0 1
    %161 = vperm.xlu0 %160, %v110
    %v162 = vpop.permute.xlu0 %161
    %vm163 = vcmp.eq.s32.totalorder %v102, %v162
    %v164 = vsel %vm163, %v147, 0.0
    %v165 = vsel %vm112, %v164, 0.0
    %166 = vadd.xlane.f32.xlu0 %v165
    %v167 = vpop.xlane.xlu0 %166
    %v168 = vsub.f32 %v159, %v167
    %v169 = vsel %vm109, %v168, 0.0
    %v170 = vsel %vm135, %v169, 0.0
    %171 = vadd.xlane.f32.xlu0 %v170
    %v172 = vpop.xlane.xlu0 %171
    %v173 = vrot.slane %v172, 4
    %v174 = vadd.f32 %v172, %v173
    %v175 = vrot.slane %v174, 2
    %v176 = vadd.f32 %v174, %v175
    %v177 = vrot.slane %v176, 1
    %v178 = vadd.f32 %v176, %v177
    %s179 = vtos %v178
    %vm180 = vcmp.eq.f32.partialorder %v167, %v150
    %vm181 = vmxor %vm146, %vm180
    %vm182 = vmxor %vm181, 1
    %v183 = vsel %vm182, 0.0, 100.0
    %v184 = vsel %vm109, %v183, 0.0
    %v185 = vsel %vm135, %v184, 0.0
    %186 = vadd.xlane.f32.xlu0 %v185
    %v187 = vpop.xlane.xlu0 %186
    %v188 = vrot.slane %v187, 4
    %v189 = vadd.f32 %v187, %v188
    %v190 = vrot.slane %v189, 2
    %v191 = vadd.f32 %v189, %v190
    %v192 = vrot.slane %v191, 1
    %v193 = vadd.f32 %v191, %v192
    %s194 = vtos %v193
    %v195 = vsel %vm180, 0.75, 0.25
    %v196 = vsel %vm109, %v195, 0.0
    %v197 = vsel %vm135, %v196, 0.0
    %198 = vadd.xlane.f32.xlu0 %v197
    %v199 = vpop.xlane.xlu0 %198
    %v200 = vrot.slane %v199, 4
    %v201 = vadd.f32 %v199, %v200
    %v202 = vrot.slane %v201, 2
    %v203 = vadd.f32 %v201, %v202
    %v204 = vrot.slane %v203, 1
    %v205 = vadd.f32 %v203, %v204
    %s206 = vtos %v205
    %s207 = sld [smem:[#allocation2]]
    %s208 = sadd.f32 %s207, %s145
    %s209 = scalar_lea.smem [#allocation2], 0
    %210 = sst [smem:[%s209]] %s208
    %s211 = sld [smem:[#allocation2 + $0x1]]
    %s212 = sadd.f32 %s211, %s179
    %s213 = scalar_lea.smem [#allocation2], 1
    %214 = sst [smem:[%s213]] %s212
    %s215 = sld [smem:[#allocation2 + $0x2]]
    %s216 = sadd.f32 %s215, %s194
    %s217 = scalar_lea.smem [#allocation2], 2
    %218 = sst [smem:[%s217]] %s216
    %s219 = sld [smem:[#allocation2 + $0x3]]
    %s220 = sadd.f32 %s219, %s206
    %s221 = scalar_lea.smem [#allocation2], 3
    %222 = sst [smem:[%s221]] %s220
    // Predicated region
    $region22: #{tpu_custom_call.1} parent=1 // pred_check
      %p223 = pneg %p89
    $region23: #{tpu_custom_call.1} parent=1 // pred_check_branch
      %225 = sbr.rel (%p223) target = $region25
    $region24: #{tpu_custom_call.1} parent=1 // pred_region
      %s226 = sld [smem:[#allocation2]]
      %s227 = scalar_lea.smem [#allocation6], 0
      %228 = sst [smem:[%s227]] %s226
      %s229 = sld [smem:[#allocation2 + $0x1]]
      %s230 = scalar_lea.smem [#allocation6], 1
      %231 = sst [smem:[%s230]] %s229
      %s232 = sld [smem:[#allocation2 + $0x2]]
      %s233 = scalar_lea.smem [#allocation6], 2
      %234 = sst [smem:[%s233]] %s232
      %s235 = sld [smem:[#allocation2 + $0x3]]
      %s236 = scalar_lea.smem [#allocation6], 3
      %237 = sst [smem:[%s236]] %s235
    $region25: #{tpu_custom_call.1} parent=1 // pred_fallthru
      _
    // Predicated region
    $region26: #{tpu_custom_call.1} parent=1 // pred_check
      _
    $region27: #{tpu_custom_call.1} parent=1 // pred_check_branch
      %239 = sbr.rel (0) target = $region29
    $region28: #{tpu_custom_call.1} parent=1 // pred_region
      %s241 = ssub.s32 16, 16
      %242 = vsyncadd [#allocation5], %s241
      %245 = dma.smem_to_hbm [#allocation6], 16, %s3, [#allocation5]
    $region29: #{tpu_custom_call.1} parent=1 // pred_fallthru
      _
    // Predicated region
    $region30: #{tpu_custom_call.1} parent=1 // pred_check
      _
    $region31: #{tpu_custom_call.1} parent=1 // pred_check_branch
      %247 = sbr.rel (0) target = $region33
    $region32: #{tpu_custom_call.1} parent=1 // pred_region
      %248 = dma.done [#allocation5], 16
    $region33: #{tpu_custom_call.1} parent=1 // pred_fallthru
      _
    %249 = sfence
    %250 = vsyncpa [#allocation4], 1
    %251 = vsyncpa [#allocation5], 1

</llo_original>
